<compile_context>
chip_gen: v7x
topology: tpu7x:2x2x1
jax: 0.10.0
libtpu: 0.0.40
codegen_flags: <defaults>
</compile_context>

<pallas_src>
import functools

import jax
import jax.numpy as jnp
from jax.experimental import pallas as pl
from jax.experimental.pallas import tpu as pltpu


def _round_up(v, m):
    return ((v + m - 1) // m) * m


def adapter_kernel(x_ref, w1_ref, b1_ref, w2_ref, b2_ref, o_ref):
    """out = relu(x @ W1 + b1) @ W2' + b2' + x   (0.1 already folded into W2', b2').

    x / out stay f32 (caller dtype); both dots run in bf16 with f32
    accumulation so the MXU works at its native rate.
    """
    x = x_ref[...]                                                      # (TM, Fp) f32
    h = jnp.dot(x.astype(w1_ref.dtype), w1_ref[...],
                preferred_element_type=jnp.float32)                     # (TM, Mid_p)
    h = jnp.maximum(h + b1_ref[...], 0.0)                               # bias + ReLU (f32)
    y = jnp.dot(h.astype(w2_ref.dtype), w2_ref[...],
                preferred_element_type=jnp.float32)                     # (TM, Fp)
    o_ref[...] = y + b2_ref[...] + x                                    # scaled residual


def _default_lane_width():
    """256-lane packing for the 2x256^2 MXUs (v6e/v7x); 128 elsewhere (v5e etc.)."""
    try:
        kind = jax.devices()[0].device_kind.lower()
    except Exception:
        return 128
    if "v6" in kind or "v7" in kind:
        return 256
    return 128


def prepare_adapter_params(w1, b1, w2, b2, *, lane_width=None,
                           compute_dtype=jnp.bfloat16):
    """One-time parameter transform (do this once at model-load time).

    * Folds the 0.1 residual scale into (w2, b2).
    * Expands the weights block-diagonally (kron(I_pack, W)) so `pack`
      original rows are processed as one lane-dense row of width lane_width.
    * Casts the expanded matmul weights to `compute_dtype` (bf16) for the MXU.
    """
    w1 = jnp.asarray(w1, jnp.float32)
    b1 = jnp.asarray(b1, jnp.float32)
    w2 = jnp.asarray(w2, jnp.float32)
    b2 = jnp.asarray(b2, jnp.float32)
    F, _ = w1.shape
    if lane_width is None:
        lane_width = _default_lane_width()

    w2s = w2 * jnp.float32(0.1)
    b2s = b2 * jnp.float32(0.1)

    # NOTE: if lane_width % F != 0 we fall back to pack=1 (still correct, just
    # sub-128 lane width / masked stores).
    pack = lane_width // F if (F < lane_width and lane_width % F == 0) else 1
    if pack > 1:
        eye = jnp.eye(pack, dtype=jnp.float32)
        w1p = jnp.kron(eye, w1)            # (F*pack, Mid*pack) block-diagonal
        w2p = jnp.kron(eye, w2s)           # (Mid*pack, F*pack) block-diagonal
        b1p = jnp.tile(b1, pack)
        b2p = jnp.tile(b2s, pack)
    else:
        w1p, w2p, b1p, b2p = w1, w2s, b1, b2s

    return dict(
        # packed / folded parameters used by the Pallas kernel
        w1p=w1p.astype(compute_dtype),
        b1p=b1p.reshape(1, -1).astype(jnp.float32),
        w2p=w2p.astype(compute_dtype),
        b2p=b2p.reshape(1, -1).astype(jnp.float32),
        # small unpacked copies for a (rare) ragged tail
        w1=w1, b1=b1, w2s=w2s, b2s=b2s,
        pack=int(pack),
        in_features=int(F),
    )


@functools.partial(jax.jit, static_argnames=("block_bytes",))
def _packed_forward(xp, w1p, b1p, w2p, b2p, *, block_bytes=2 << 20):
    """xp: (Mp, Fp) f32 packed rows -> (Mp, Fp) f32."""
    Mp, Fp = xp.shape
    Mid_p = w1p.shape[1]

    # Row tile: target ~block_bytes (1-2 MiB) per x/out block to amortize the
    # per-grid-step overhead, but keep >= ~4 grid steps on larger inputs so
    # BlockSpec double-buffering overlaps DMA with compute and v7x can shard
    # the row axis across both TensorCores.
    tm = max(16, (block_bytes // (Fp * 4)) // 16 * 16)
    if Mp > 64:
        tm = min(tm, _round_up(pl.cdiv(Mp, 4), 16))
    tm = min(tm, Mp)
    grid = (pl.cdiv(Mp, tm),)

    # Explicit VMEM budget: double-buffered x and out tiles + (double-buffered)
    # resident weights + scratch slack.  Stays well under 64 MiB (v7x/TC) and
    # 128 MiB (v5e/v6e) even with the largest default tiles.
    tile_bytes = tm * Fp * 4
    w_bytes = ((w1p.size + w2p.size) * w1p.dtype.itemsize
               + (b1p.size + b2p.size) * 4)
    vmem_limit = int(4 * tile_bytes + 2 * w_bytes + (8 << 20))

    return pl.pallas_call(
        adapter_kernel,
        out_shape=jax.ShapeDtypeStruct((Mp, Fp), jnp.float32),
        grid=grid,
        in_specs=[
            pl.BlockSpec((tm, Fp), lambda i: (i, 0)),       # x: streamed per row tile
            pl.BlockSpec((Fp, Mid_p), lambda i: (0, 0)),    # weights/biases: constant
            pl.BlockSpec((1, Mid_p), lambda i: (0, 0)),     #   index_map -> fetched once,
            pl.BlockSpec((Mid_p, Fp), lambda i: (0, 0)),    #   stay resident in VMEM
            pl.BlockSpec((1, Fp), lambda i: (0, 0)),
        ],
        out_specs=pl.BlockSpec((tm, Fp), lambda i: (i, 0)),
        compiler_params=pltpu.CompilerParams(
            dimension_semantics=("parallel",),
            vmem_limit_bytes=vmem_limit,
        ),
    )(xp, w1p, b1p, w2p, b2p)


def adapter_forward(x2d, params, *, block_bytes=2 << 20):
    """x2d: (M, F) float32 -> (M, F) float32.  `params` from prepare_adapter_params."""
    M, F = x2d.shape
    assert F == params["in_features"], "feature width mismatch with prepared params"
    pack = params["pack"]

    # Rows that fill whole packed rows go through the Pallas kernel; any ragged
    # tail (< pack rows) is handled with plain JAX -- no full-tensor pad/slice.
    M_main = (M // pack) * pack
    outs = []
    if M_main:
        if M_main == M:
            xp = x2d.reshape(M // pack, F * pack)
        else:
            xp = x2d[:M_main].reshape(M_main // pack, F * pack)
        out_main = _packed_forward(xp, params["w1p"], params["b1p"],
                                   params["w2p"], params["b2p"],
                                   block_bytes=block_bytes)
        outs.append(out_main.reshape(M_main, F))
    if M_main != M:
        tail = x2d[M_main:]
        h = jnp.maximum(tail @ params["w1"] + params["b1"], 0.0)
        outs.append(h @ params["w2s"] + params["b2s"] + tail)
    return outs[0] if len(outs) == 1 else jnp.concatenate(outs, axis=0)


def adapter_ref(x2d, w1, b1, w2, b2):
    """Pure-JAX f32 reference mirroring the PyTorch module (unscaled params)."""
    h = jnp.maximum(x2d @ w1 + b1, 0.0)
    y = h @ w2 + b2
    return 0.1 * y + x2d


if __name__ == "__main__":
    # Small shapes consistent with the module: in_features=32, mid_features=16,
    # batch=2, seq=8.
    batch, seq = 2, 8
    in_features, mid_features = 32, 16

    key = jax.random.PRNGKey(0)
    kx, k1, k2, k3, k4 = jax.random.split(key, 5)

    x = jax.random.normal(kx, (batch, seq, in_features), dtype=jnp.float32)

    # nn.Linear-like uniform fan-in init, stored pre-transposed as (in, out).
    bound1 = 1.0 / (in_features ** 0.5)
    w1 = jax.random.uniform(k1, (in_features, mid_features),
                            minval=-bound1, maxval=bound1, dtype=jnp.float32)
    b1 = jax.random.uniform(k2, (mid_features,),
                            minval=-bound1, maxval=bound1, dtype=jnp.float32)
    bound2 = 1.0 / (mid_features ** 0.5)
    w2 = jax.random.uniform(k3, (mid_features, in_features),
                            minval=-bound2, maxval=bound2, dtype=jnp.float32)
    b2 = jax.random.uniform(k4, (in_features,),
                            minval=-bound2, maxval=bound2, dtype=jnp.float32)

    # One-time parameter prep (0.1 fold + lane-dense block-diagonal packing + bf16).
    params = prepare_adapter_params(w1, b1, w2, b2)

    x2d = x.reshape(batch * seq, in_features)
    out2d = adapter_forward(x2d, params)
    out = out2d.reshape(batch, seq, in_features)
    jax.block_until_ready(out)

    ref = adapter_ref(x2d, w1, b1, w2, b2).reshape(batch, seq, in_features)
    # Tolerance relaxed vs pure-f32 because the two dots run in bf16 (f32 accumulate).
    assert jnp.allclose(out, ref, atol=1e-2, rtol=1e-2), "mismatch vs reference"

    print("KERNEL_OK")
</pallas_src>

<mosaic_0001>
module attributes {stable_mosaic.version = 11 : i64} {
  func.func @adapter_kernel(%arg0: i32, %arg1: memref<4x128xf32, #tpu.memory_space<vmem>>, %arg2: memref<128x64xbf16, #tpu.memory_space<vmem>>, %arg3: memref<1x64xf32, #tpu.memory_space<vmem>>, %arg4: memref<64x128xbf16, #tpu.memory_space<vmem>>, %arg5: memref<1x128xf32, #tpu.memory_space<vmem>>, %arg6: memref<4x128xf32, #tpu.memory_space<vmem>>) attributes {dimension_semantics = [#tpu.dimension_semantics<parallel>], iteration_bounds = array<i64: 1>, scalar_prefetch = 0 : i64, scratch_operands = 0 : i64, tpu.core_type = #tpu.core_type<tc>, window_params = [{transform_indices = @transform_0, window_bounds = array<i64: 4, 128>}, {pipeline_mode = #tpu.pipeline_mode<synchronous>, transform_indices = @transform_1, window_bounds = array<i64: 128, 64>}, {pipeline_mode = #tpu.pipeline_mode<synchronous>, transform_indices = @transform_2, window_bounds = array<i64: 1, 64>}, {pipeline_mode = #tpu.pipeline_mode<synchronous>, transform_indices = @transform_3, window_bounds = array<i64: 64, 128>}, {pipeline_mode = #tpu.pipeline_mode<synchronous>, transform_indices = @transform_4, window_bounds = array<i64: 1, 128>}, {transform_indices = @transform_5, window_bounds = array<i64: 4, 128>}]} {
    %c0 = arith.constant 0 : index
    %c0_0 = arith.constant 0 : index
    %0 = vector.load %arg1[%c0, %c0_0] : memref<4x128xf32, #tpu.memory_space<vmem>>, vector<4x128xf32>
    %1 = arith.truncf %0 : vector<4x128xf32> to vector<4x128xbf16>
    %c0_1 = arith.constant 0 : index
    %c0_2 = arith.constant 0 : index
    %2 = vector.load %arg2[%c0_1, %c0_2] : memref<128x64xbf16, #tpu.memory_space<vmem>>, vector<128x64xbf16>
    %cst = arith.constant dense<0.000000e+00> : vector<4x64xf32>
    %3 = tpu.matmul %1, %2, %cst {dimension_numbers = #tpu.dot_dimension_numbers<[1], [0], [0], [1], [0, 0, 1, 1], [], []>} : vector<4x128xbf16>, vector<128x64xbf16>, vector<4x64xf32> -> vector<4x64xf32>
    %c0_3 = arith.constant 0 : index
    %c0_4 = arith.constant 0 : index
    %4 = vector.load %arg3[%c0_3, %c0_4] : memref<1x64xf32, #tpu.memory_space<vmem>>, vector<1x64xf32>
    %5 = vector.broadcast %4 : vector<1x64xf32> to vector<4x64xf32>
    %6 = arith.addf %3, %5 : vector<4x64xf32>
    %cst_5 = arith.constant 0.000000e+00 : f32
    %7 = vector.broadcast %cst_5 : f32 to vector<4x64xf32>
    %8 = arith.maximumf %6, %7 : vector<4x64xf32>
    %9 = arith.truncf %8 : vector<4x64xf32> to vector<4x64xbf16>
    %c0_6 = arith.constant 0 : index
    %c0_7 = arith.constant 0 : index
    %10 = vector.load %arg4[%c0_6, %c0_7] : memref<64x128xbf16, #tpu.memory_space<vmem>>, vector<64x128xbf16>
    %cst_8 = arith.constant dense<0.000000e+00> : vector<4x128xf32>
    %11 = tpu.matmul %9, %10, %cst_8 {dimension_numbers = #tpu.dot_dimension_numbers<[1], [0], [0], [1], [0, 0, 1, 1], [], []>} : vector<4x64xbf16>, vector<64x128xbf16>, vector<4x128xf32> -> vector<4x128xf32>
    %c0_9 = arith.constant 0 : index
    %c0_10 = arith.constant 0 : index
    %12 = vector.load %arg5[%c0_9, %c0_10] : memref<1x128xf32, #tpu.memory_space<vmem>>, vector<1x128xf32>
    %13 = vector.broadcast %12 : vector<1x128xf32> to vector<4x128xf32>
    %14 = arith.addf %11, %13 : vector<4x128xf32>
    %15 = arith.addf %14, %0 : vector<4x128xf32>
    %c0_11 = arith.constant 0 : index
    %c0_12 = arith.constant 0 : index
    %16 = vector.load %arg6[%c0_11, %c0_12] : memref<4x128xf32, #tpu.memory_space<vmem>>, vector<4x128xf32>
    tpu.vector_store %arg6[%c0_11, %c0_12], %15 {strides = array<i32>} : memref<4x128xf32, #tpu.memory_space<vmem>>, vector<4x128xf32>,
    return
  }
  func.func @transform_0(%arg0: i32) -> (i32, i32) {
    %c0_i32 = arith.constant 0 : i32
    %c0_i32_0 = arith.constant 0 : i32
    return %arg0, %c0_i32 : i32, i32
  }
  func.func @transform_1(%arg0: i32) -> (i32, i32) {
    %c0_i32 = arith.constant 0 : i32
    %c0_i32_0 = arith.constant 0 : i32
    %c0_i32_1 = arith.constant 0 : i32
    return %c0_i32, %c0_i32_0 : i32, i32
  }
  func.func @transform_2(%arg0: i32) -> (i32, i32) {
    %c0_i32 = arith.constant 0 : i32
    %c0_i32_0 = arith.constant 0 : i32
    %c0_i32_1 = arith.constant 0 : i32
    return %c0_i32, %c0_i32_0 : i32, i32
  }
  func.func @transform_3(%arg0: i32) -> (i32, i32) {
    %c0_i32 = arith.constant 0 : i32
    %c0_i32_0 = arith.constant 0 : i32
    %c0_i32_1 = arith.constant 0 : i32
    return %c0_i32, %c0_i32_0 : i32, i32
  }
  func.func @transform_4(%arg0: i32) -> (i32, i32) {
    %c0_i32 = arith.constant 0 : i32
    %c0_i32_0 = arith.constant 0 : i32
    %c0_i32_1 = arith.constant 0 : i32
    return %c0_i32, %c0_i32_0 : i32, i32
  }
  func.func @transform_5(%arg0: i32) -> (i32, i32) {
    %c0_i32 = arith.constant 0 : i32
    %c0_i32_0 = arith.constant 0 : i32
    return %arg0, %c0_i32 : i32, i32
  }
}

</mosaic_0001>

<llo_original>
// kernel: _packed_forward.1
$region0: #{_packed_forward.1}
  #allocation0 [shape = 'u32[]', space=smem, size = 0x4, offset = 0x4, fixed_abs, tag = 'smem constant byte address 0x4 - core index']
  #allocation1 [shape = 'u32[144,128]{1,0:T(1,128)}', space=vmem, size = 0x12000, scoped, tag = 'internal scratch']
  %s0 = inlined_call_operand.vmem [shape: f32[4,128], index: 0, kind: input, shape index: {}]
  %s1 = inlined_call_operand.vmem [shape: bf16[128,64], index: 1, kind: input, shape index: {}]
  %s2 = inlined_call_operand.vmem [shape: f32[1,64], index: 2, kind: input, shape index: {}]
  %s3 = inlined_call_operand.vmem [shape: bf16[64,128], index: 3, kind: input, shape index: {}]
  %s4 = inlined_call_operand.vmem [shape: f32[1,128], index: 4, kind: input, shape index: {}]
  %s5 = inlined_call_operand.hbm [shape: f32[4,128], index: 5, kind: output, shape index: {}]
  %s6 = sld [smem:[#allocation0]]
  $region30: #{_packed_forward.1} parent=0
    _
  %s8 = ssub.s32 1, %s6
  %s9 = scalar_select 0, %s8, %s6
  $region1: #{_packed_forward.1} parent=0
    #allocation2 [shape = 'u8[2048]{0}', space=vmem, size = 0x800, scoped, tag = 'output window, operand 0, single buffered']
    #allocation3 [shape = 's32[1]{0}', space=sflag, size = 0x4, scoped, tag = 'scoped memory for _packed_forward.1']
    %10 = vsyncpa [#allocation3], 0
    // Predicated region
    $region2: #{_packed_forward.1} parent=1 // pred_check
      _
    $region3: #{_packed_forward.1} parent=1 // pred_check_branch
      %12 = sbr.rel (0) target = $region5
    $region4: #{_packed_forward.1} parent=1 // pred_region
      _
    $region5: #{_packed_forward.1} parent=1 // pred_fallthru
      _
    // Predicated region
    $region6: #{_packed_forward.1} parent=1 // pred_check
      _
    $region7: #{_packed_forward.1} parent=1 // pred_check_branch
      %14 = sbr.rel (0) target = $region9
    $region8: #{_packed_forward.1} parent=1 // pred_region
      _
    $region9: #{_packed_forward.1} parent=1 // pred_fallthru
      _
    // Predicated region
    $region10: #{_packed_forward.1} parent=1 // pred_check
      _
    $region11: #{_packed_forward.1} parent=1 // pred_check_branch
      %16 = sbr.rel (0) target = $region13
    $region12: #{_packed_forward.1} parent=1 // pred_region
      _
    $region13: #{_packed_forward.1} parent=1 // pred_fallthru
      _
    // Predicated region
    $region14: #{_packed_forward.1} parent=1 // pred_check
      _
    $region15: #{_packed_forward.1} parent=1 // pred_check_branch
      %18 = sbr.rel (0) target = $region17
    $region16: #{_packed_forward.1} parent=1 // pred_region
      _
    $region17: #{_packed_forward.1} parent=1 // pred_fallthru
      _
    // Predicated region
    $region18: #{_packed_forward.1} parent=1 // pred_check
      _
    $region19: #{_packed_forward.1} parent=1 // pred_check_branch
      %20 = sbr.rel (0) target = $region21
    $region20: #{_packed_forward.1} parent=1 // pred_region
      _
    $region21: #{_packed_forward.1} parent=1 // pred_fallthru
      _
    %v22 = vld [vmem:[%s0] sm:$0xf]
    %v23 = vpack.c.bf16 %v22, %v22
    %v24 = vld [vmem:[%s1] sm:$0xf]
    %v25 = vld [vmem:[%s1 + $0x4] sm:$0xf]
    %v26 = vld [vmem:[%s1 + $0x8] sm:$0xf]
    %v27 = vld [vmem:[%s1 + $0xc] sm:$0xf]
    %v28 = vld [vmem:[%s1 + $0x10] sm:$0xf]
    %v29 = vld [vmem:[%s1 + $0x14] sm:$0xf]
    %v30 = vld [vmem:[%s1 + $0x18] sm:$0xf]
    %v31 = vld [vmem:[%s1 + $0x1c] sm:$0xf]
    %v32 = vld [vmem:[%s1 + $0x20] sm:$0xf]
    %v33 = vld [vmem:[%s1 + $0x24] sm:$0xf]
    %v34 = vld [vmem:[%s1 + $0x28] sm:$0xf]
    %v35 = vld [vmem:[%s1 + $0x2c] sm:$0xf]
    %v36 = vld [vmem:[%s1 + $0x30] sm:$0xf]
    %v37 = vld [vmem:[%s1 + $0x34] sm:$0xf]
    %v38 = vld [vmem:[%s1 + $0x38] sm:$0xf]
    %v39 = vld [vmem:[%s1 + $0x3c] sm:$0xf]
    %v40 = vld [vmem:[%s2] sm:$0x1]
    %v42 = vlaneseq
    %v43 = vshrl.u32 %v42, 7
    %v44 = vsub.s32 0, %v43
    %v45 = vrot.slane %v40, %v44
    %v63 = vunpack.c.l.b16 %v24
    %v64 = vunpack.c.l.b16 %v25
    %v65 = vunpack.c.l.b16 %v26
    %v66 = vunpack.c.l.b16 %v27
    %v67 = vunpack.c.l.b16 %v28
    %v68 = vunpack.c.l.b16 %v29
    %v69 = vunpack.c.l.b16 %v30
    %v70 = vunpack.c.l.b16 %v31
    %v71 = vunpack.c.l.b16 %v32
    %v72 = vunpack.c.l.b16 %v33
    %v73 = vunpack.c.l.b16 %v34
    %v74 = vunpack.c.l.b16 %v35
    %v75 = vunpack.c.l.b16 %v36
    %v76 = vunpack.c.l.b16 %v37
    %v77 = vunpack.c.l.b16 %v38
    %v78 = vunpack.c.l.b16 %v39
    %v79 = vpack.c.b16 %v64, %v63
    %v80 = vpack.c.b16 %v66, %v65
    %v81 = vpack.c.b16 %v68, %v67
    %v82 = vpack.c.b16 %v70, %v69
    %v83 = vpack.c.b16 %v72, %v71
    %v84 = vpack.c.b16 %v74, %v73
    %v85 = vpack.c.b16 %v76, %v75
    %v86 = vpack.c.b16 %v78, %v77
    %95 = vmatprep.subr.bf16.mxu0 0
    %96 = vmatpush1.bf16.msra.mxu0 %v79
    %97 = vmatprep.subr.bf16.mxu0 0
    %98 = vmatpush1.bf16.msra.mxu0 %v80
    %99 = vmatprep.subr.bf16.mxu0 0
    %100 = vmatpush1.bf16.msra.mxu0 %v81
    %101 = vmatprep.subr.bf16.mxu0 0
    %102 = vmatpush1.bf16.msra.mxu0 %v82
    %103 = vmatprep.subr.bf16.mxu0 0
    %104 = vmatpush1.bf16.msra.mxu0 %v83
    %105 = vmatprep.subr.bf16.mxu0 0
    %106 = vmatpush1.bf16.msra.mxu0 %v84
    %107 = vmatprep.subr.bf16.mxu0 0
    %108 = vmatpush1.bf16.msra.mxu0 %v85
    %109 = vmatprep.subr.bf16.mxu0 0
    %110 = vmatpush1.bf16.msra.mxu0 %v86
    %111 = vmatprep.subr.bf16.mxu0 0
    %112 = vmatpush1.bf16.msra.mxu0 0
    %113 = vmatprep.subr.bf16.mxu0 0
    %114 = vmatpush1.bf16.msra.mxu0 0
    %115 = vmatprep.subr.bf16.mxu0 0
    %116 = vmatpush1.bf16.msra.mxu0 0
    %117 = vmatprep.subr.bf16.mxu0 0
    %118 = vmatpush1.bf16.msra.mxu0 0
    %119 = vmatprep.subr.bf16.mxu0 0
    %120 = vmatpush1.bf16.msra.mxu0 0
    %121 = vmatprep.subr.bf16.mxu0 0
    %122 = vmatpush1.bf16.msra.mxu0 0
    %123 = vmatprep.subr.bf16.mxu0 0
    %124 = vmatpush1.bf16.msra.mxu0 0
    %125 = vmatprep.subr.bf16.mxu0 0
    %126 = vmatpush1.bf16.msra.mxu0 0
    %127 = vmatprep.mubr.bf16.mxu0 0
    %128 = vmatmul.mubr.bf16.gmra.mrb[0].mxu0 %v23
    %v129 = vpop.f32.mrb[0].mxu0
    %v130 = vadd.f32 %v45, %v129
    %v131 = vpop.f32.mrb[0].mxu0
    %v132 = vpop.f32.mrb[0].mxu0
    %v133 = vpop.f32.mrb[0].mxu0
    %134 = vdwg.mxu0
    %v135 = vmax.f32 %v130, 0.0
    %v136 = vpack.c.bf16 %v135, %v135
    %v137 = vld [vmem:[%s3] sm:$0xf]
    %v138 = vld [vmem:[%s3 + $0x4] sm:$0xf]
    %v139 = vld [vmem:[%s3 + $0x8] sm:$0xf]
    %v140 = vld [vmem:[%s3 + $0xc] sm:$0xf]
    %v141 = vld [vmem:[%s3 + $0x10] sm:$0xf]
    %v142 = vld [vmem:[%s3 + $0x14] sm:$0xf]
    %v143 = vld [vmem:[%s3 + $0x18] sm:$0xf]
    %v144 = vld [vmem:[%s3 + $0x1c] sm:$0xf]
    %v145 = vld [vmem:[%s4] sm:$0x1]
    %v147 = vlaneseq
    %v148 = vshrl.u32 %v147, 7
    %v149 = vsub.s32 0, %v148
    %v150 = vrot.slane %v145, %v149
    %v160 = vunpack.c.l.b16 %v137
    %v161 = vunpack.c.l.b16 %v138
    %v162 = vunpack.c.l.b16 %v139
    %v163 = vunpack.c.l.b16 %v140
    %v164 = vunpack.c.l.b16 %v141
    %v165 = vunpack.c.l.b16 %v142
    %v166 = vunpack.c.l.b16 %v143
    %v167 = vunpack.c.l.b16 %v144
    %v168 = vpack.c.b16 %v161, %v160
    %v169 = vpack.c.b16 %v163, %v162
    %v170 = vpack.c.b16 %v165, %v164
    %v171 = vpack.c.b16 %v167, %v166
    %vm176 = vcmask 523264
    %v178 = vsel %vm176, %v136, 0
    %180 = vmatprep.subr.bf16.mxu0 0
    %181 = vmatpush1.bf16.msra.mxu0 %v168
    %182 = vmatprep.subr.bf16.mxu0 0
    %183 = vmatpush1.bf16.msra.mxu0 %v169
    %184 = vmatprep.subr.bf16.mxu0 0
    %185 = vmatpush1.bf16.msra.mxu0 %v170
    %186 = vmatprep.subr.bf16.mxu0 0
    %187 = vmatpush1.bf16.msra.mxu0 %v171
    %188 = vmatprep.subr.bf16.mxu0 0
    %189 = vmatpush1.bf16.msra.mxu0 0
    %190 = vmatprep.subr.bf16.mxu0 0
    %191 = vmatpush1.bf16.msra.mxu0 0
    %192 = vmatprep.subr.bf16.mxu0 0
    %193 = vmatpush1.bf16.msra.mxu0 0
    %194 = vmatprep.subr.bf16.mxu0 0
    %195 = vmatpush1.bf16.msra.mxu0 0
    %196 = vmatprep.subr.bf16.mxu0 0
    %197 = vmatpush1.bf16.msra.mxu0 0
    %198 = vmatprep.subr.bf16.mxu0 0
    %199 = vmatpush1.bf16.msra.mxu0 0
    %200 = vmatprep.subr.bf16.mxu0 0
    %201 = vmatpush1.bf16.msra.mxu0 0
    %202 = vmatprep.subr.bf16.mxu0 0
    %203 = vmatpush1.bf16.msra.mxu0 0
    %204 = vmatprep.subr.bf16.mxu0 0
    %205 = vmatpush1.bf16.msra.mxu0 0
    %206 = vmatprep.subr.bf16.mxu0 0
    %207 = vmatpush1.bf16.msra.mxu0 0
    %208 = vmatprep.subr.bf16.mxu0 0
    %209 = vmatpush1.bf16.msra.mxu0 0
    %210 = vmatprep.subr.bf16.mxu0 0
    %211 = vmatpush1.bf16.msra.mxu0 0
    %212 = vmatprep.mubr.bf16.mxu0 0
    %213 = vmatmul.mubr.bf16.gmra.mrb[0].mxu0 %v178
    %v214 = vpop.f32.mrb[0].mxu0
    %v215 = vadd.f32 %v150, %v214
    %v216 = vpop.f32.mrb[0].mxu0
    %v217 = vpop.f32.mrb[0].mxu0
    %v218 = vpop.f32.mrb[0].mxu0
    %219 = vdwg.mxu0
    %v220 = vadd.f32 %v215, %v22
    %221 = vst [vmem:[#allocation2] sm:$0xf] %v220
    // Predicated region
    $region22: #{_packed_forward.1} parent=1 // pred_check
      _
    $region23: #{_packed_forward.1} parent=1 // pred_check_branch
      %223 = sbr.rel (0) target = $region25
    $region24: #{_packed_forward.1} parent=1 // pred_region
      %s225 = ssub.s32 64, 64
      %226 = vsyncadd [#allocation3], %s225
      %s228 = sshll.u32 [#allocation2], 4
      %s229 = int_to_ptr.vmem [resolvable:$true] %s228
      %231 = dma.vmem_to_hbm [thread:$0]  %s229, 64, %s5, [#allocation3]
    $region25: #{_packed_forward.1} parent=1 // pred_fallthru
      _
    // Predicated region
    $region26: #{_packed_forward.1} parent=1 // pred_check
      _
    $region27: #{_packed_forward.1} parent=1 // pred_check_branch
      %233 = sbr.rel (0) target = $region29
    $region28: #{_packed_forward.1} parent=1 // pred_region
      %234 = dma.done [#allocation3], 64
    $region29: #{_packed_forward.1} parent=1 // pred_fallthru
      _
    %235 = vsyncpa [#allocation3], 1

</llo_original>
